<compile_context>
chip_gen: v6e
topology: v6e:2x2x1
jax: 0.10.0
libtpu: 0.0.40
codegen_flags: <defaults>
</compile_context>

<pallas_src>
import functools

import jax
import jax.numpy as jnp
from jax.experimental import pallas as pl
from jax.experimental.pallas import tpu as pltpu

hidden_size = 5
input_size = 5
num_classes = 5
num_layers = 1
sequence_length = 6

_LANE = 128      # last-dim vreg width (f32)
_SUBLANE = 8     # second-to-last vreg width (f32)


def _round_up(n, m):
    return ((n + m - 1) // m) * m


def rnn_kernel(x_ref, w_ih_ref, w_hh_ref, b_ref, out_ref, *, seq_len):
    """Elman RNN recurrence on padded operands.

    x_ref:    (T*Bp, Ip)  VMEM  (time-major, zero-padded; rows t*Bp..t*Bp+Bp-1 = step t)
    w_ih_ref: (Ip, Hp)    VMEM  (W_ih^T, zero-padded)
    w_hh_ref: (Hp, Hp)    VMEM  (W_hh^T, zero-padded)
    b_ref:    (1, Hp)     VMEM  (b_ih + b_hh, zero-padded)
    out_ref:  (Bp, T*Hp)  VMEM  (batch-major: step t lives in lanes t*Hp..(t+1)*Hp-1)
    """
    hp = w_hh_ref.shape[-1]
    bp = x_ref.shape[0] // seq_len

    # One lane-dense MXU pass for the input projection of ALL timesteps plus a
    # single bias broadcast — hoisted off the serial recurrence and kept in
    # vregs (T*Bp x Hp = 6 vregs here), so no per-step VMEM load is needed.
    pre = (
        jnp.dot(x_ref[...], w_ih_ref[...], preferred_element_type=jnp.float32)
        + b_ref[...]
    )

    # Fully unrolled serial recurrence (T=6). Per step on the critical path:
    # one (Bp,Hp)@(Hp,Hp) MXU pass + VPU add + EUP tanh + one full-tile store.
    # Hidden state stays in vregs the whole time.
    h = jnp.zeros((bp, hp), jnp.float32)
    for t in range(seq_len):
        pre_t = pre[t * bp:(t + 1) * bp, :]                 # static, sublane-aligned slice
        h = jnp.tanh(
            pre_t
            + jnp.dot(h, w_hh_ref[...], preferred_element_type=jnp.float32)
        )
        # Batch-major output: lane offset t*Hp is a multiple of 128, so this is
        # a full, unmasked tile store (no vst.msk) and no wrapper transpose.
        out_ref[:, t * hp:(t + 1) * hp] = h


def rnn_forward(x, w_ih, w_hh, b_ih, b_hh):
    """x: (B, T, I) float32, batch_first like the PyTorch module.

    Returns (B*T, num_classes) float32, matching `out.view(-1, num_classes)`.
    """
    B, T, I = x.shape
    H = w_ih.shape[0]
    # out.view(-1, num_classes) only makes sense if hidden_size == num_classes.
    assert H == num_classes, "reshape assumes hidden_size == num_classes"

    Bp = _round_up(B, _SUBLANE)
    Ip = _round_up(I, _LANE)
    Hp = _round_up(H, _LANE)

    # Zero-padded, time-major, flattened x.  Pad + transpose fuse into the one
    # XLA copy the padding requires anyway.  Zero-padded weight columns/rows and
    # zero bias padding keep the padded hidden lanes exactly 0 through the
    # recurrence (tanh(0)=0), so the final slice is exact.
    x_tm = jnp.transpose(x.astype(jnp.float32), (1, 0, 2))            # (T, B, I)
    x_p = (
        jnp.zeros((T, Bp, Ip), jnp.float32)
        .at[:, :B, :I].set(x_tm)
        .reshape(T * Bp, Ip)
    )
    w_ih_p = jnp.zeros((Ip, Hp), jnp.float32).at[:I, :H].set(w_ih.T)
    w_hh_p = jnp.zeros((Hp, Hp), jnp.float32).at[:H, :H].set(w_hh.T)
    b_p = jnp.zeros((1, Hp), jnp.float32).at[0, :H].set(b_ih + b_hh)

    kernel = functools.partial(rnn_kernel, seq_len=T)

    out_p = pl.pallas_call(
        kernel,
        out_shape=jax.ShapeDtypeStruct((Bp, T * Hp), jnp.float32),
        in_specs=[pl.BlockSpec(memory_space=pltpu.MemorySpace.VMEM)] * 4,
        out_specs=pl.BlockSpec(memory_space=pltpu.MemorySpace.VMEM),
    )(x_p, w_ih_p, w_hh_p, b_p)

    # Output is already batch-major: (Bp, T*Hp) -> (B, T, H) -> (B*T, classes).
    # No transpose — only a slice/reshape, which fuses into the consumer.
    out = out_p.reshape(Bp, T, Hp)[:B, :, :H]
    return out.reshape(-1, num_classes)


def _reference(x, w_ih, w_hh, b_ih, b_hh):
    """Pure-JAX reference of the same recurrence for a correctness check."""
    B, T, I = x.shape
    H = w_ih.shape[0]
    h = jnp.zeros((B, H), jnp.float32)
    outs = []
    for t in range(T):
        h = jnp.tanh(x[:, t, :] @ w_ih.T + b_ih + h @ w_hh.T + b_hh)
        outs.append(h)
    return jnp.stack(outs, axis=1).reshape(-1, num_classes)


if __name__ == "__main__":
    key = jax.random.PRNGKey(0)
    k_x, k1, k2, k3, k4 = jax.random.split(key, 5)

    batch = 2
    # Deterministic parameter init (PyTorch-style U(-1/sqrt(H), 1/sqrt(H)) bounds).
    bound = 1.0 / jnp.sqrt(jnp.float32(hidden_size))
    w_ih = jax.random.uniform(k1, (hidden_size, input_size), jnp.float32, -bound, bound)
    w_hh = jax.random.uniform(k2, (hidden_size, hidden_size), jnp.float32, -bound, bound)
    b_ih = jax.random.uniform(k3, (hidden_size,), jnp.float32, -bound, bound)
    b_hh = jax.random.uniform(k4, (hidden_size,), jnp.float32, -bound, bound)

    x = jax.random.normal(k_x, (batch, sequence_length, input_size), jnp.float32)

    fwd = jax.jit(rnn_forward)
    out = jax.block_until_ready(fwd(x, w_ih, w_hh, b_ih, b_hh))
    ref = _reference(x, w_ih, w_hh, b_ih, b_hh)

    assert out.shape == (batch * sequence_length, num_classes), out.shape
    assert jnp.allclose(out, ref, atol=1e-5, rtol=1e-5), "mismatch vs reference"
    print("KERNEL_OK")
</pallas_src>

<mosaic_0001>
module attributes {stable_mosaic.version = 11 : i64} {
  func.func @rnn_kernel(%arg0: memref<48x128xf32, #tpu.memory_space<vmem>>, %arg1: memref<128x128xf32, #tpu.memory_space<vmem>>, %arg2: memref<128x128xf32, #tpu.memory_space<vmem>>, %arg3: memref<1x128xf32, #tpu.memory_space<vmem>>, %arg4: memref<8x768xf32, #tpu.memory_space<vmem>>) attributes {dimension_semantics = [], scalar_prefetch = 0 : i64, scratch_operands = 0 : i64, tpu.core_type = #tpu.core_type<tc>} {
    %c0 = arith.constant 0 : index
    %c0_0 = arith.constant 0 : index
    %0 = vector.load %arg0[%c0, %c0_0] : memref<48x128xf32, #tpu.memory_space<vmem>>, vector<48x128xf32>
    %c0_1 = arith.constant 0 : index
    %c0_2 = arith.constant 0 : index
    %1 = vector.load %arg1[%c0_1, %c0_2] : memref<128x128xf32, #tpu.memory_space<vmem>>, vector<128x128xf32>
    %cst = arith.constant dense<0.000000e+00> : vector<48x128xf32>
    %2 = tpu.matmul %0, %1, %cst {dimension_numbers = #tpu.dot_dimension_numbers<[1], [0], [0], [1], [0, 0, 1, 1], [], []>} : vector<48x128xf32>, vector<128x128xf32>, vector<48x128xf32> -> vector<48x128xf32>
    %c0_3 = arith.constant 0 : index
    %c0_4 = arith.constant 0 : index
    %3 = vector.load %arg3[%c0_3, %c0_4] : memref<1x128xf32, #tpu.memory_space<vmem>>, vector<1x128xf32>
    %4 = vector.broadcast %3 : vector<1x128xf32> to vector<48x128xf32>
    %5 = arith.addf %2, %4 : vector<48x128xf32>
    %cst_5 = arith.constant 0.000000e+00 : f32
    %6 = vector.broadcast %cst_5 : f32 to vector<8x128xf32>
    %7 = vector.extract_strided_slice %5 {offsets = [0, 0], sizes = [8, 128], strides = [1, 1]} : vector<48x128xf32> to vector<8x128xf32>
    %c0_6 = arith.constant 0 : index
    %c0_7 = arith.constant 0 : index
    %8 = vector.load %arg2[%c0_6, %c0_7] : memref<128x128xf32, #tpu.memory_space<vmem>>, vector<128x128xf32>
    %cst_8 = arith.constant dense<0.000000e+00> : vector<8x128xf32>
    %9 = tpu.matmul %6, %8, %cst_8 {dimension_numbers = #tpu.dot_dimension_numbers<[1], [0], [0], [1], [0, 0, 1, 1], [], []>} : vector<8x128xf32>, vector<128x128xf32>, vector<8x128xf32> -> vector<8x128xf32>
    %10 = arith.addf %7, %9 : vector<8x128xf32>
    %11 = math.tanh %10 : vector<8x128xf32>
    %c0_9 = arith.constant 0 : index
    %c0_10 = arith.constant 0 : index
    %12 = vector.load %arg4[%c0_9, %c0_10] : memref<8x768xf32, #tpu.memory_space<vmem>>, vector<8x128xf32>
    tpu.vector_store %arg4[%c0_9, %c0_10], %11 {strides = array<i32>} : memref<8x768xf32, #tpu.memory_space<vmem>>, vector<8x128xf32>,
    %13 = vector.extract_strided_slice %5 {offsets = [8, 0], sizes = [8, 128], strides = [1, 1]} : vector<48x128xf32> to vector<8x128xf32>
    %c0_11 = arith.constant 0 : index
    %c0_12 = arith.constant 0 : index
    %14 = vector.load %arg2[%c0_11, %c0_12] : memref<128x128xf32, #tpu.memory_space<vmem>>, vector<128x128xf32>
    %cst_13 = arith.constant dense<0.000000e+00> : vector<8x128xf32>
    %15 = tpu.matmul %11, %14, %cst_13 {dimension_numbers = #tpu.dot_dimension_numbers<[1], [0], [0], [1], [0, 0, 1, 1], [], []>} : vector<8x128xf32>, vector<128x128xf32>, vector<8x128xf32> -> vector<8x128xf32>
    %16 = arith.addf %13, %15 : vector<8x128xf32>
    %17 = math.tanh %16 : vector<8x128xf32>
    %c0_14 = arith.constant 0 : index
    %c128 = arith.constant 128 : index
    %18 = vector.load %arg4[%c0_14, %c128] : memref<8x768xf32, #tpu.memory_space<vmem>>, vector<8x128xf32>
    tpu.vector_store %arg4[%c0_14, %c128], %17 {strides = array<i32>} : memref<8x768xf32, #tpu.memory_space<vmem>>, vector<8x128xf32>,
    %19 = vector.extract_strided_slice %5 {offsets = [16, 0], sizes = [8, 128], strides = [1, 1]} : vector<48x128xf32> to vector<8x128xf32>
    %c0_15 = arith.constant 0 : index
    %c0_16 = arith.constant 0 : index
    %20 = vector.load %arg2[%c0_15, %c0_16] : memref<128x128xf32, #tpu.memory_space<vmem>>, vector<128x128xf32>
    %cst_17 = arith.constant dense<0.000000e+00> : vector<8x128xf32>
    %21 = tpu.matmul %17, %20, %cst_17 {dimension_numbers = #tpu.dot_dimension_numbers<[1], [0], [0], [1], [0, 0, 1, 1], [], []>} : vector<8x128xf32>, vector<128x128xf32>, vector<8x128xf32> -> vector<8x128xf32>
    %22 = arith.addf %19, %21 : vector<8x128xf32>
    %23 = math.tanh %22 : vector<8x128xf32>
    %c0_18 = arith.constant 0 : index
    %c256 = arith.constant 256 : index
    %24 = vector.load %arg4[%c0_18, %c256] : memref<8x768xf32, #tpu.memory_space<vmem>>, vector<8x128xf32>
    tpu.vector_store %arg4[%c0_18, %c256], %23 {strides = array<i32>} : memref<8x768xf32, #tpu.memory_space<vmem>>, vector<8x128xf32>,
    %25 = vector.extract_strided_slice %5 {offsets = [24, 0], sizes = [8, 128], strides = [1, 1]} : vector<48x128xf32> to vector<8x128xf32>
    %c0_19 = arith.constant 0 : index
    %c0_20 = arith.constant 0 : index
    %26 = vector.load %arg2[%c0_19, %c0_20] : memref<128x128xf32, #tpu.memory_space<vmem>>, vector<128x128xf32>
    %cst_21 = arith.constant dense<0.000000e+00> : vector<8x128xf32>
    %27 = tpu.matmul %23, %26, %cst_21 {dimension_numbers = #tpu.dot_dimension_numbers<[1], [0], [0], [1], [0, 0, 1, 1], [], []>} : vector<8x128xf32>, vector<128x128xf32>, vector<8x128xf32> -> vector<8x128xf32>
    %28 = arith.addf %25, %27 : vector<8x128xf32>
    %29 = math.tanh %28 : vector<8x128xf32>
    %c0_22 = arith.constant 0 : index
    %c384 = arith.constant 384 : index
    %30 = vector.load %arg4[%c0_22, %c384] : memref<8x768xf32, #tpu.memory_space<vmem>>, vector<8x128xf32>
    tpu.vector_store %arg4[%c0_22, %c384], %29 {strides = array<i32>} : memref<8x768xf32, #tpu.memory_space<vmem>>, vector<8x128xf32>,
    %31 = vector.extract_strided_slice %5 {offsets = [32, 0], sizes = [8, 128], strides = [1, 1]} : vector<48x128xf32> to vector<8x128xf32>
    %c0_23 = arith.constant 0 : index
    %c0_24 = arith.constant 0 : index
    %32 = vector.load %arg2[%c0_23, %c0_24] : memref<128x128xf32, #tpu.memory_space<vmem>>, vector<128x128xf32>
    %cst_25 = arith.constant dense<0.000000e+00> : vector<8x128xf32>
    %33 = tpu.matmul %29, %32, %cst_25 {dimension_numbers = #tpu.dot_dimension_numbers<[1], [0], [0], [1], [0, 0, 1, 1], [], []>} : vector<8x128xf32>, vector<128x128xf32>, vector<8x128xf32> -> vector<8x128xf32>
    %34 = arith.addf %31, %33 : vector<8x128xf32>
    %35 = math.tanh %34 : vector<8x128xf32>
    %c0_26 = arith.constant 0 : index
    %c512 = arith.constant 512 : index
    %36 = vector.load %arg4[%c0_26, %c512] : memref<8x768xf32, #tpu.memory_space<vmem>>, vector<8x128xf32>
    tpu.vector_store %arg4[%c0_26, %c512], %35 {strides = array<i32>} : memref<8x768xf32, #tpu.memory_space<vmem>>, vector<8x128xf32>,
    %37 = vector.extract_strided_slice %5 {offsets = [40, 0], sizes = [8, 128], strides = [1, 1]} : vector<48x128xf32> to vector<8x128xf32>
    %c0_27 = arith.constant 0 : index
    %c0_28 = arith.constant 0 : index
    %38 = vector.load %arg2[%c0_27, %c0_28] : memref<128x128xf32, #tpu.memory_space<vmem>>, vector<128x128xf32>
    %cst_29 = arith.constant dense<0.000000e+00> : vector<8x128xf32>
    %39 = tpu.matmul %35, %38, %cst_29 {dimension_numbers = #tpu.dot_dimension_numbers<[1], [0], [0], [1], [0, 0, 1, 1], [], []>} : vector<8x128xf32>, vector<128x128xf32>, vector<8x128xf32> -> vector<8x128xf32>
    %40 = arith.addf %37, %39 : vector<8x128xf32>
    %41 = math.tanh %40 : vector<8x128xf32>
    %c0_30 = arith.constant 0 : index
    %c640 = arith.constant 640 : index
    %42 = vector.load %arg4[%c0_30, %c640] : memref<8x768xf32, #tpu.memory_space<vmem>>, vector<8x128xf32>
    tpu.vector_store %arg4[%c0_30, %c640], %41 {strides = array<i32>} : memref<8x768xf32, #tpu.memory_space<vmem>>, vector<8x128xf32>,
    return
  }
}

</mosaic_0001>

<llo_original>
// kernel: rnn_forward.1
$region0: #{rnn_forward.1}
  #allocation0 [shape = 'u32[]', space=smem, size = 0x4, offset = 0x4, fixed_abs, tag = 'smem constant byte address 0x4 - core index']
  #allocation1 [shape = 'u32[144,128]{1,0:T(1,128)}', space=vmem, size = 0x12000, scoped, tag = 'internal scratch']
  %s0 = inlined_call_operand.vmem [shape: f32[48,128], index: 0, kind: input, shape index: {}]
  %s1 = inlined_call_operand.vmem [shape: f32[128,128], index: 1, kind: input, shape index: {}]
  %s2 = inlined_call_operand.vmem [shape: f32[128,128], index: 2, kind: input, shape index: {}]
  %s3 = inlined_call_operand.vmem [shape: f32[1,128], index: 3, kind: input, shape index: {}]
  %s4 = inlined_call_operand.vmem [shape: f32[8,768], index: 4, kind: output, shape index: {}]
  %s5 = sld [smem:[#allocation0]]
  $region26: #{rnn_forward.1} parent=0
    _
  %s7 = ssub.s32 1, %s5
  %s8 = scalar_select 0, %s7, %s5
  // Predicated region
  $region2: #{rnn_forward.1} parent=0 // pred_check
    _
  $region3: #{rnn_forward.1} parent=0 // pred_check_branch
    %10 = sbr.rel (0) target = $region5
  $region4: #{rnn_forward.1} parent=0 // pred_region
    _
  $region5: #{rnn_forward.1} parent=0 // pred_fallthru
    _
  // Predicated region
  $region6: #{rnn_forward.1} parent=0 // pred_check
    _
  $region7: #{rnn_forward.1} parent=0 // pred_check_branch
    %12 = sbr.rel (0) target = $region9
  $region8: #{rnn_forward.1} parent=0 // pred_region
    _
  $region9: #{rnn_forward.1} parent=0 // pred_fallthru
    _
  // Predicated region
  $region10: #{rnn_forward.1} parent=0 // pred_check
    _
  $region11: #{rnn_forward.1} parent=0 // pred_check_branch
    %14 = sbr.rel (0) target = $region13
  $region12: #{rnn_forward.1} parent=0 // pred_region
    _
  $region13: #{rnn_forward.1} parent=0 // pred_fallthru
    _
  // Predicated region
  $region14: #{rnn_forward.1} parent=0 // pred_check
    _
  $region15: #{rnn_forward.1} parent=0 // pred_check_branch
    %16 = sbr.rel (0) target = $region17
  $region16: #{rnn_forward.1} parent=0 // pred_region
    _
  $region17: #{rnn_forward.1} parent=0 // pred_fallthru
    _
  %v17 = vld [vmem:[%s0] sm:$0xff]
  %v18 = vld [vmem:[%s0 + $0x8] sm:$0xff]
  %v19 = vld [vmem:[%s0 + $0x10] sm:$0xff]
  %v20 = vld [vmem:[%s0 + $0x18] sm:$0xff]
  %v21 = vld [vmem:[%s0 + $0x20] sm:$0xff]
  %v22 = vld [vmem:[%s0 + $0x28] sm:$0xff]
  %v23 = vld [vmem:[%s1] sm:$0xff]
  %v24 = vld [vmem:[%s1 + $0x8] sm:$0xff]
  %v25 = vld [vmem:[%s1 + $0x10] sm:$0xff]
  %v26 = vld [vmem:[%s1 + $0x18] sm:$0xff]
  %v27 = vld [vmem:[%s1 + $0x20] sm:$0xff]
  %v28 = vld [vmem:[%s1 + $0x28] sm:$0xff]
  %v29 = vld [vmem:[%s1 + $0x30] sm:$0xff]
  %v30 = vld [vmem:[%s1 + $0x38] sm:$0xff]
  %v31 = vld [vmem:[%s1 + $0x40] sm:$0xff]
  %v32 = vld [vmem:[%s1 + $0x48] sm:$0xff]
  %v33 = vld [vmem:[%s1 + $0x50] sm:$0xff]
  %v34 = vld [vmem:[%s1 + $0x58] sm:$0xff]
  %v35 = vld [vmem:[%s1 + $0x60] sm:$0xff]
  %v36 = vld [vmem:[%s1 + $0x68] sm:$0xff]
  %v37 = vld [vmem:[%s1 + $0x70] sm:$0xff]
  %v38 = vld [vmem:[%s1 + $0x78] sm:$0xff]
  %v39 = vld [vmem:[%s3] sm:$0x1]
  %v41 = vlaneseq
  %v42 = vshrl.u32 %v41, 7
  %v43 = vsub.s32 0, %v42
  %v44 = vrot.slane %v39, %v43
  %46 = vmatprep.subr.mxu0 0.0
  %47 = vmatpush1.msra.mxu0 %v38
  %48 = vmatprep.subr.mxu0 0.0
  %49 = vmatpush1.msra.mxu0 %v37
  %50 = vmatprep.subr.mxu0 0.0
  %51 = vmatpush1.msra.mxu0 %v36
  %52 = vmatprep.subr.mxu0 0.0
  %53 = vmatpush1.msra.mxu0 %v35
  %54 = vmatprep.subr.mxu0 0.0
  %55 = vmatpush1.msra.mxu0 %v34
  %56 = vmatprep.subr.mxu0 0.0
  %57 = vmatpush1.msra.mxu0 %v33
  %58 = vmatprep.subr.mxu0 0.0
  %59 = vmatpush1.msra.mxu0 %v32
  %60 = vmatprep.subr.mxu0 0.0
  %61 = vmatpush1.msra.mxu0 %v31
  %62 = vmatprep.subr.mxu0 0.0
  %63 = vmatpush1.msra.mxu0 %v30
  %64 = vmatprep.subr.mxu0 0.0
  %65 = vmatpush1.msra.mxu0 %v29
  %66 = vmatprep.subr.mxu0 0.0
  %67 = vmatpush1.msra.mxu0 %v28
  %68 = vmatprep.subr.mxu0 0.0
  %69 = vmatpush1.msra.mxu0 %v27
  %70 = vmatprep.subr.mxu0 0.0
  %71 = vmatpush1.msra.mxu0 %v26
  %72 = vmatprep.subr.mxu0 0.0
  %73 = vmatpush1.msra.mxu0 %v25
  %74 = vmatprep.subr.mxu0 0.0
  %75 = vmatpush1.msra.mxu0 %v24
  %76 = vmatprep.subr.mxu0 0.0
  %77 = vmatpush1.msra.mxu0 %v23
  %78 = vmatprep.subr.mxu0 0.0
  %79 = vmatpush2.msra.mxu0 0.0
  %80 = vmatprep.subr.mxu0 0.0
  %81 = vmatpush2.msra.mxu0 0.0
  %82 = vmatprep.subr.mxu0 0.0
  %83 = vmatpush2.msra.mxu0 0.0
  %84 = vmatprep.subr.mxu0 0.0
  %85 = vmatpush2.msra.mxu0 0.0
  %86 = vmatprep.subr.mxu0 0.0
  %87 = vmatpush2.msra.mxu0 0.0
  %88 = vmatprep.subr.mxu0 0.0
  %89 = vmatpush2.msra.mxu0 0.0
  %90 = vmatprep.subr.mxu0 0.0
  %91 = vmatpush2.msra.mxu0 0.0
  %92 = vmatprep.subr.mxu0 0.0
  %93 = vmatpush2.msra.mxu0 0.0
  %94 = vmatprep.subr.mxu0 0.0
  %95 = vmatpush2.msra.mxu0 0.0
  %96 = vmatprep.subr.mxu0 0.0
  %97 = vmatpush2.msra.mxu0 0.0
  %98 = vmatprep.subr.mxu0 0.0
  %99 = vmatpush2.msra.mxu0 0.0
  %100 = vmatprep.subr.mxu0 0.0
  %101 = vmatpush2.msra.mxu0 0.0
  %102 = vmatprep.subr.mxu0 0.0
  %103 = vmatpush2.msra.mxu0 0.0
  %104 = vmatprep.subr.mxu0 0.0
  %105 = vmatpush2.msra.mxu0 0.0
  %106 = vmatprep.subr.mxu0 0.0
  %107 = vmatpush2.msra.mxu0 0.0
  %108 = vmatprep.subr.mxu0 0.0
  %109 = vmatpush2.msra.mxu0 0.0
  %110 = vmatprep.mubr.f32.mxu0 0.0
  %111 = vmatmul.mubr.f32.gmra.mxu0 %v17
  %v112 = vpop.f32.mrf.mxu0
  %v113 = vadd.f32 %v44, %v112
  %v114 = vpop.f32.mrf.mxu0
  %115 = vmatprep.mubr.f32.mxu0 0.0
  %116 = vmatmul.mubr.f32.gmra.mxu0 %v18
  %v117 = vpop.f32.mrf.mxu0
  %v118 = vadd.f32 %v44, %v117
  %v119 = vpop.f32.mrf.mxu0
  %120 = vmatprep.mubr.f32.mxu0 0.0
  %121 = vmatmul.mubr.f32.gmra.mxu0 %v19
  %v122 = vpop.f32.mrf.mxu0
  %v123 = vadd.f32 %v44, %v122
  %v124 = vpop.f32.mrf.mxu0
  %125 = vmatprep.mubr.f32.mxu0 0.0
  %126 = vmatmul.mubr.f32.gmra.mxu0 %v20
  %v127 = vpop.f32.mrf.mxu0
  %v128 = vadd.f32 %v44, %v127
  %v129 = vpop.f32.mrf.mxu0
  %130 = vmatprep.mubr.f32.mxu0 0.0
  %131 = vmatmul.mubr.f32.gmra.mxu0 %v21
  %v132 = vpop.f32.mrf.mxu0
  %v133 = vadd.f32 %v44, %v132
  %v134 = vpop.f32.mrf.mxu0
  %135 = vmatprep.mubr.f32.mxu0 0.0
  %136 = vmatmul.mubr.f32.gmra.mxu0 %v22
  %v137 = vpop.f32.mrf.mxu0
  %v138 = vadd.f32 %v44, %v137
  %v139 = vpop.f32.mrf.mxu0
  %140 = vdwg.mxu0
  %v141 = vld [vmem:[%s2] sm:$0xff]
  %v142 = vld [vmem:[%s2 + $0x8] sm:$0xff]
  %v143 = vld [vmem:[%s2 + $0x10] sm:$0xff]
  %v144 = vld [vmem:[%s2 + $0x18] sm:$0xff]
  %v145 = vld [vmem:[%s2 + $0x20] sm:$0xff]
  %v146 = vld [vmem:[%s2 + $0x28] sm:$0xff]
  %v147 = vld [vmem:[%s2 + $0x30] sm:$0xff]
  %v148 = vld [vmem:[%s2 + $0x38] sm:$0xff]
  %v149 = vld [vmem:[%s2 + $0x40] sm:$0xff]
  %v150 = vld [vmem:[%s2 + $0x48] sm:$0xff]
  %v151 = vld [vmem:[%s2 + $0x50] sm:$0xff]
  %v152 = vld [vmem:[%s2 + $0x58] sm:$0xff]
  %v153 = vld [vmem:[%s2 + $0x60] sm:$0xff]
  %v154 = vld [vmem:[%s2 + $0x68] sm:$0xff]
  %v155 = vld [vmem:[%s2 + $0x70] sm:$0xff]
  %v156 = vld [vmem:[%s2 + $0x78] sm:$0xff]
  %157 = vmatprep.subr.mxu0 0.0
  %158 = vmatpush1.msra.mxu0 %v156
  %159 = vmatprep.subr.mxu0 0.0
  %160 = vmatpush1.msra.mxu0 %v155
  %161 = vmatprep.subr.mxu0 0.0
  %162 = vmatpush1.msra.mxu0 %v154
  %163 = vmatprep.subr.mxu0 0.0
  %164 = vmatpush1.msra.mxu0 %v153
  %165 = vmatprep.subr.mxu0 0.0
  %166 = vmatpush1.msra.mxu0 %v152
  %167 = vmatprep.subr.mxu0 0.0
  %168 = vmatpush1.msra.mxu0 %v151
  %169 = vmatprep.subr.mxu0 0.0
  %170 = vmatpush1.msra.mxu0 %v150
  %171 = vmatprep.subr.mxu0 0.0
  %172 = vmatpush1.msra.mxu0 %v149
  %173 = vmatprep.subr.mxu0 0.0
  %174 = vmatpush1.msra.mxu0 %v148
  %175 = vmatprep.subr.mxu0 0.0
  %176 = vmatpush1.msra.mxu0 %v147
  %177 = vmatprep.subr.mxu0 0.0
  %178 = vmatpush1.msra.mxu0 %v146
  %179 = vmatprep.subr.mxu0 0.0
  %180 = vmatpush1.msra.mxu0 %v145
  %181 = vmatprep.subr.mxu0 0.0
  %182 = vmatpush1.msra.mxu0 %v144
  %183 = vmatprep.subr.mxu0 0.0
  %184 = vmatpush1.msra.mxu0 %v143
  %185 = vmatprep.subr.mxu0 0.0
  %186 = vmatpush1.msra.mxu0 %v142
  %187 = vmatprep.subr.mxu0 0.0
  %188 = vmatpush1.msra.mxu0 %v141
  %189 = vmatprep.subr.mxu0 0.0
  %190 = vmatpush2.msra.mxu0 0.0
  %191 = vmatprep.subr.mxu0 0.0
  %192 = vmatpush2.msra.mxu0 0.0
  %193 = vmatprep.subr.mxu0 0.0
  %194 = vmatpush2.msra.mxu0 0.0
  %195 = vmatprep.subr.mxu0 0.0
  %196 = vmatpush2.msra.mxu0 0.0
  %197 = vmatprep.subr.mxu0 0.0
  %198 = vmatpush2.msra.mxu0 0.0
  %199 = vmatprep.subr.mxu0 0.0
  %200 = vmatpush2.msra.mxu0 0.0
  %201 = vmatprep.subr.mxu0 0.0
  %202 = vmatpush2.msra.mxu0 0.0
  %203 = vmatprep.subr.mxu0 0.0
  %204 = vmatpush2.msra.mxu0 0.0
  %205 = vmatprep.subr.mxu0 0.0
  %206 = vmatpush2.msra.mxu0 0.0
  %207 = vmatprep.subr.mxu0 0.0
  %208 = vmatpush2.msra.mxu0 0.0
  %209 = vmatprep.subr.mxu0 0.0
  %210 = vmatpush2.msra.mxu0 0.0
  %211 = vmatprep.subr.mxu0 0.0
  %212 = vmatpush2.msra.mxu0 0.0
  %213 = vmatprep.subr.mxu0 0.0
  %214 = vmatpush2.msra.mxu0 0.0
  %215 = vmatprep.subr.mxu0 0.0
  %216 = vmatpush2.msra.mxu0 0.0
  %217 = vmatprep.subr.mxu0 0.0
  %218 = vmatpush2.msra.mxu0 0.0
  %219 = vmatprep.subr.mxu0 0.0
  %220 = vmatpush2.msra.mxu0 0.0
  %221 = vmatprep.mubr.f32.mxu0 0.0
  %222 = vmatmul.mubr.f32.gmra.mxu0 0.0
  %v223 = vpop.f32.mrf.mxu0
  %v224 = vadd.f32 0.0, %v223
  %v225 = vpop.f32.mrf.mxu0
  %226 = vdwg.mxu0
  %v227 = vadd.f32 %v113, %v224
  %v228 = vtanh.pop %v227
  %229 = vst [vmem:[%s4] sm:$0xff] %v228
  %v230 = vld [vmem:[%s2] sm:$0xff]
  %v231 = vld [vmem:[%s2 + $0x8] sm:$0xff]
  %v232 = vld [vmem:[%s2 + $0x10] sm:$0xff]
  %v233 = vld [vmem:[%s2 + $0x18] sm:$0xff]
  %v234 = vld [vmem:[%s2 + $0x20] sm:$0xff]
  %v235 = vld [vmem:[%s2 + $0x28] sm:$0xff]
  %v236 = vld [vmem:[%s2 + $0x30] sm:$0xff]
  %v237 = vld [vmem:[%s2 + $0x38] sm:$0xff]
  %v238 = vld [vmem:[%s2 + $0x40] sm:$0xff]
  %v239 = vld [vmem:[%s2 + $0x48] sm:$0xff]
  %v240 = vld [vmem:[%s2 + $0x50] sm:$0xff]
  %v241 = vld [vmem:[%s2 + $0x58] sm:$0xff]
  %v242 = vld [vmem:[%s2 + $0x60] sm:$0xff]
  %v243 = vld [vmem:[%s2 + $0x68] sm:$0xff]
  %v244 = vld [vmem:[%s2 + $0x70] sm:$0xff]
  %v245 = vld [vmem:[%s2 + $0x78] sm:$0xff]
  %246 = vmatprep.subr.mxu0 0.0
  %247 = vmatpush1.msra.mxu0 %v245
  %248 = vmatprep.subr.mxu0 0.0
  %249 = vmatpush1.msra.mxu0 %v244
  %250 = vmatprep.subr.mxu0 0.0
  %251 = vmatpush1.msra.mxu0 %v243
  %252 = vmatprep.subr.mxu0 0.0
  %253 = vmatpush1.msra.mxu0 %v242
  %254 = vmatprep.subr.mxu0 0.0
  %255 = vmatpush1.msra.mxu0 %v241
  %256 = vmatprep.subr.mxu0 0.0
  %257 = vmatpush1.msra.mxu0 %v240
  %258 = vmatprep.subr.mxu0 0.0
  %259 = vmatpush1.msra.mxu0 %v239
  %260 = vmatprep.subr.mxu0 0.0
  %261 = vmatpush1.msra.mxu0 %v238
  %262 = vmatprep.subr.mxu0 0.0
  %263 = vmatpush1.msra.mxu0 %v237
  %264 = vmatprep.subr.mxu0 0.0
  %265 = vmatpush1.msra.mxu0 %v236
  %266 = vmatprep.subr.mxu0 0.0
  %267 = vmatpush1.msra.mxu0 %v235
  %268 = vmatprep.subr.mxu0 0.0
  %269 = vmatpush1.msra.mxu0 %v234
  %270 = vmatprep.subr.mxu0 0.0
  %271 = vmatpush1.msra.mxu0 %v233
  %272 = vmatprep.subr.mxu0 0.0
  %273 = vmatpush1.msra.mxu0 %v232
  %274 = vmatprep.subr.mxu0 0.0
  %275 = vmatpush1.msra.mxu0 %v231
  %276 = vmatprep.subr.mxu0 0.0
  %277 = vmatpush1.msra.mxu0 %v230
  %278 = vmatprep.subr.mxu0 0.0
  %279 = vmatpush2.msra.mxu0 0.0
  %280 = vmatprep.subr.mxu0 0.0
  %281 = vmatpush2.msra.mxu0 0.0
  %282 = vmatprep.subr.mxu0 0.0
  %283 = vmatpush2.msra.mxu0 0.0
  %284 = vmatprep.subr.mxu0 0.0
  %285 = vmatpush2.msra.mxu0 0.0
  %286 = vmatprep.subr.mxu0 0.0
  %287 = vmatpush2.msra.mxu0 0.0
  %288 = vmatprep.subr.mxu0 0.0
  %289 = vmatpush2.msra.mxu0 0.0
  %290 = vmatprep.subr.mxu0 0.0
  %291 = vmatpush2.msra.mxu0 0.0
  %292 = vmatprep.subr.mxu0 0.0
  %293 = vmatpush2.msra.mxu0 0.0
  %294 = vmatprep.subr.mxu0 0.0
  %295 = vmatpush2.msra.mxu0 0.0
  %296 = vmatprep.subr.mxu0 0.0
  %297 = vmatpush2.msra.mxu0 0.0
  %298 = vmatprep.subr.mxu0 0.0
  %299 = vmatpush2.msra.mxu0 0.0
  %300 = vmatprep.subr.mxu0 0.0
  %301 = vmatpush2.msra.mxu0 0.0
  %302 = vmatprep.subr.mxu0 0.0
  %303 = vmatpush2.msra.mxu0 0.0
  %304 = vmatprep.subr.mxu0 0.0
  %305 = vmatpush2.msra.mxu0 0.0
  %306 = vmatprep.subr.mxu0 0.0
  %307 = vmatpush2.msra.mxu0 0.0
  %308 = vmatprep.subr.mxu0 0.0
  %309 = vmatpush2.msra.mxu0 0.0
  %310 = vmatprep.mubr.f32.mxu0 0.0
  %311 = vmatmul.mubr.f32.gmra.mxu0 %v228
  %v312 = vpop.f32.mrf.mxu0
  %v313 = vadd.f32 0.0, %v312
  %v314 = vpop.f32.mrf.mxu0
  %315 = vdwg.mxu0
  %v316 = vadd.f32 %v118, %v313
  %v317 = vtanh.pop %v316
  %318 = vst [vmem:[%s4 + $0x8] sm:$0xff] %v317
  %v319 = vld [vmem:[%s2] sm:$0xff]
  %v320 = vld [vmem:[%s2 + $0x8] sm:$0xff]
  %v321 = vld [vmem:[%s2 + $0x10] sm:$0xff]
  %v322 = vld [vmem:[%s2 + $0x18] sm:$0xff]
  %v323 = vld [vmem:[%s2 + $0x20] sm:$0xff]
  %v324 = vld [vmem:[%s2 + $0x28] sm:$0xff]
  %v325 = vld [vmem:[%s2 + $0x30] sm:$0xff]
  %v326 = vld [vmem:[%s2 + $0x38] sm:$0xff]
  %v327 = vld [vmem:[%s2 + $0x40] sm:$0xff]
  %v328 = vld [vmem:[%s2 + $0x48] sm:$0xff]
  %v329 = vld [vmem:[%s2 + $0x50] sm:$0xff]
  %v330 = vld [vmem:[%s2 + $0x58] sm:$0xff]
  %v331 = vld [vmem:[%s2 + $0x60] sm:$0xff]
  %v332 = vld [vmem:[%s2 + $0x68] sm:$0xff]
  %v333 = vld [vmem:[%s2 + $0x70] sm:$0xff]
  %v334 = vld [vmem:[%s2 + $0x78] sm:$0xff]
  %335 = vmatprep.subr.mxu0 0.0
  %336 = vmatpush1.msra.mxu0 %v334
  %337 = vmatprep.subr.mxu0 0.0
  %338 = vmatpush1.msra.mxu0 %v333
  %339 = vmatprep.subr.mxu0 0.0
  %340 = vmatpush1.msra.mxu0 %v332
  %341 = vmatprep.subr.mxu0 0.0
  %342 = vmatpush1.msra.mxu0 %v331
  %343 = vmatprep.subr.mxu0 0.0
  %344 = vmatpush1.msra.mxu0 %v330
  %345 = vmatprep.subr.mxu0 0.0
  %346 = vmatpush1.msra.mxu0 %v329
  %347 = vmatprep.subr.mxu0 0.0
  %348 = vmatpush1.msra.mxu0 %v328
  %349 = vmatprep.subr.mxu0 0.0
  %350 = vmatpush1.msra.mxu0 %v327
  %351 = vmatprep.subr.mxu0 0.0
  %352 = vmatpush1.msra.mxu0 %v326
  %353 = vmatprep.subr.mxu0 0.0
  %354 = vmatpush1.msra.mxu0 %v325
  %355 = vmatprep.subr.mxu0 0.0
  %356 = vmatpush1.msra.mxu0 %v324
  %357 = vmatprep.subr.mxu0 0.0
  %358 = vmatpush1.msra.mxu0 %v323
  %359 = vmatprep.subr.mxu0 0.0
  %360 = vmatpush1.msra.mxu0 %v322
  %361 = vmatprep.subr.mxu0 0.0
  %362 = vmatpush1.msra.mxu0 %v321
  %363 = vmatprep.subr.mxu0 0.0
  %364 = vmatpush1.msra.mxu0 %v320
  %365 = vmatprep.subr.mxu0 0.0
  %366 = vmatpush1.msra.mxu0 %v319
  %367 = vmatprep.subr.mxu0 0.0
  %368 = vmatpush2.msra.mxu0 0.0
  %369 = vmatprep.subr.mxu0 0.0
  %370 = vmatpush2.msra.mxu0 0.0
  %371 = vmatprep.subr.mxu0 0.0
  %372 = vmatpush2.msra.mxu0 0.0
  %373 = vmatprep.subr.mxu0 0.0
  %374 = vmatpush2.msra.mxu0 0.0
  %375 = vmatprep.subr.mxu0 0.0
  %376 = vmatpush2.msra.mxu0 0.0
  %377 = vmatprep.subr.mxu0 0.0
  %378 = vmatpush2.msra.mxu0 0.0
  %379 = vmatprep.subr.mxu0 0.0
  %380 = vmatpush2.msra.mxu0 0.0
  %381 = vmatprep.subr.mxu0 0.0
  %382 = vmatpush2.msra.mxu0 0.0
  %383 = vmatprep.subr.mxu0 0.0
  %384 = vmatpush2.msra.mxu0 0.0
  %385 = vmatprep.subr.mxu0 0.0
  %386 = vmatpush2.msra.mxu0 0.0
  %387 = vmatprep.subr.mxu0 0.0
  %388 = vmatpush2.msra.mxu0 0.0
  %389 = vmatprep.subr.mxu0 0.0
  %390 = vmatpush2.msra.mxu0 0.0
  %391 = vmatprep.subr.mxu0 0.0
  %392 = vmatpush2.msra.mxu0 0.0
  %393 = vmatprep.subr.mxu0 0.0
  %394 = vmatpush2.msra.mxu0 0.0
  %395 = vmatprep.subr.mxu0 0.0
  %396 = vmatpush2.msra.mxu0 0.0
  %397 = vmatprep.subr.mxu0 0.0
  %398 = vmatpush2.msra.mxu0 0.0
  %399 = vmatprep.mubr.f32.mxu0 0.0
  %400 = vmatmul.mubr.f32.gmra.mxu0 %v317
  %v401 = vpop.f32.mrf.mxu0
  %v402 = vadd.f32 0.0, %v401
  %v403 = vpop.f32.mrf.mxu0
  %404 = vdwg.mxu0
  %v405 = vadd.f32 %v123, %v402
  %v406 = vtanh.pop %v405
  %407 = vst [vmem:[%s4 + $0x10] sm:$0xff] %v406
  %v408 = vld [vmem:[%s2] sm:$0xff]
  %v409 = vld [vmem:[%s2 + $0x8] sm:$0xff]
  %v410 = vld [vmem:[%s2 + $0x10] sm:$0xff]
  %v411 = vld [vmem:[%s2 + $0x18] sm:$0xff]
  %v412 = vld [vmem:[%s2 + $0x20] sm:$0xff]
  %v413 = vld [vmem:[%s2 + $0x28] sm:$0xff]
  %v414 = vld [vmem:[%s2 + $0x30] sm:$0xff]
  %v415 = vld [vmem:[%s2 + $0x38] sm:$0xff]
  %v416 = vld [vmem:[%s2 + $0x40] sm:$0xff]
  %v417 = vld [vmem:[%s2 + $0x48] sm:$0xff]
  %v418 = vld [vmem:[%s2 + $0x50] sm:$0xff]
  %v419 = vld [vmem:[%s2 + $0x58] sm:$0xff]
  %v420 = vld [vmem:[%s2 + $0x60] sm:$0xff]
  %v421 = vld [vmem:[%s2 + $0x68] sm:$0xff]
  %v422 = vld [vmem:[%s2 + $0x70] sm:$0xff]
  %v423 = vld [vmem:[%s2 + $0x78] sm:$0xff]
  %424 = vmatprep.subr.mxu0 0.0
  %425 = vmatpush1.msra.mxu0 %v423
  %426 = vmatprep.subr.mxu0 0.0
  %427 = vmatpush1.msra.mxu0 %v422
  %428 = vmatprep.subr.mxu0 0.0
  %429 = vmatpush1.msra.mxu0 %v421
  %430 = vmatprep.subr.mxu0 0.0
  %431 = vmatpush1.msra.mxu0 %v420
  %432 = vmatprep.subr.mxu0 0.0
  %433 = vmatpush1.msra.mxu0 %v419
  %434 = vmatprep.subr.mxu0 0.0
  %435 = vmatpush1.msra.mxu0 %v418
  %436 = vmatprep.subr.mxu0 0.0
  %437 = vmatpush1.msra.mxu0 %v417
  %438 = vmatprep.subr.mxu0 0.0
  %439 = vmatpush1.msra.mxu0 %v416
  %440 = vmatprep.subr.mxu0 0.0
  %441 = vmatpush1.msra.mxu0 %v415
  %442 = vmatprep.subr.mxu0 0.0
  %443 = vmatpush1.msra.mxu0 %v414
  %444 = vmatprep.subr.mxu0 0.0
  %445 = vmatpush1.msra.mxu0 %v413
  %446 = vmatprep.subr.mxu0 0.0
  %447 = vmatpush1.msra.mxu0 %v412
  %448 = vmatprep.subr.mxu0 0.0
  %449 = vmatpush1.msra.mxu0 %v411
  %450 = vmatprep.subr.mxu0 0.0
  %451 = vmatpush1.msra.mxu0 %v410
  %452 = vmatprep.subr.mxu0 0.0
  %453 = vmatpush1.msra.mxu0 %v409
  %454 = vmatprep.subr.mxu0 0.0
  %455 = vmatpush1.msra.mxu0 %v408
  %456 = vmatprep.subr.mxu0 0.0
  %457 = vmatpush2.msra.mxu0 0.0
  %458 = vmatprep.subr.mxu0 0.0
  %459 = vmatpush2.msra.mxu0 0.0
  %460 = vmatprep.subr.mxu0 0.0
  %461 = vmatpush2.msra.mxu0 0.0
  %462 = vmatprep.subr.mxu0 0.0
  %463 = vmatpush2.msra.mxu0 0.0
  %464 = vmatprep.subr.mxu0 0.0
  %465 = vmatpush2.msra.mxu0 0.0
  %466 = vmatprep.subr.mxu0 0.0
  %467 = vmatpush2.msra.mxu0 0.0
  %468 = vmatprep.subr.mxu0 0.0
  %469 = vmatpush2.msra.mxu0 0.0
  %470 = vmatprep.subr.mxu0 0.0
  %471 = vmatpush2.msra.mxu0 0.0
  %472 = vmatprep.subr.mxu0 0.0
  %473 = vmatpush2.msra.mxu0 0.0
  %474 = vmatprep.subr.mxu0 0.0
  %475 = vmatpush2.msra.mxu0 0.0
  %476 = vmatprep.subr.mxu0 0.0
  %477 = vmatpush2.msra.mxu0 0.0
  %478 = vmatprep.subr.mxu0 0.0
  %479 = vmatpush2.msra.mxu0 0.0
  %480 = vmatprep.subr.mxu0 0.0
  %481 = vmatpush2.msra.mxu0 0.0
  %482 = vmatprep.subr.mxu0 0.0
  %483 = vmatpush2.msra.mxu0 0.0
  %484 = vmatprep.subr.mxu0 0.0
  %485 = vmatpush2.msra.mxu0 0.0
  %486 = vmatprep.subr.mxu0 0.0
  %487 = vmatpush2.msra.mxu0 0.0
  %488 = vmatprep.mubr.f32.mxu0 0.0
  %489 = vmatmul.mubr.f32.gmra.mxu0 %v406
  %v490 = vpop.f32.mrf.mxu0
  %v491 = vadd.f32 0.0, %v490
  %v492 = vpop.f32.mrf.mxu0
  %493 = vdwg.mxu0
  %v494 = vadd.f32 %v128, %v491
  %v495 = vtanh.pop %v494
  %496 = vst [vmem:[%s4 + $0x18] sm:$0xff] %v495
  %v497 = vld [vmem:[%s2] sm:$0xff]
  %v498 = vld [vmem:[%s2 + $0x8] sm:$0xff]
  %v499 = vld [vmem:[%s2 + $0x10] sm:$0xff]
  %v500 = vld [vmem:[%s2 + $0x18] sm:$0xff]
  %v501 = vld [vmem:[%s2 + $0x20] sm:$0xff]
  %v502 = vld [vmem:[%s2 + $0x28] sm:$0xff]
  %v503 = vld [vmem:[%s2 + $0x30] sm:$0xff]
  %v504 = vld [vmem:[%s2 + $0x38] sm:$0xff]
  %v505 = vld [vmem:[%s2 + $0x40] sm:$0xff]
  %v506 = vld [vmem:[%s2 + $0x48] sm:$0xff]
  %v507 = vld [vmem:[%s2 + $0x50] sm:$0xff]
  %v508 = vld [vmem:[%s2 + $0x58] sm:$0xff]
  %v509 = vld [vmem:[%s2 + $0x60] sm:$0xff]
  %v510 = vld [vmem:[%s2 + $0x68] sm:$0xff]
  %v511 = vld [vmem:[%s2 + $0x70] sm:$0xff]
  %v512 = vld [vmem:[%s2 + $0x78] sm:$0xff]
  %513 = vmatprep.subr.mxu0 0.0
  %514 = vmatpush1.msra.mxu0 %v512
  %515 = vmatprep.subr.mxu0 0.0
  %516 = vmatpush1.msra.mxu0 %v511
  %517 = vmatprep.subr.mxu0 0.0
  %518 = vmatpush1.msra.mxu0 %v510
  %519 = vmatprep.subr.mxu0 0.0
  %520 = vmatpush1.msra.mxu0 %v509
  %521 = vmatprep.subr.mxu0 0.0
  %522 = vmatpush1.msra.mxu0 %v508
  %523 = vmatprep.subr.mxu0 0.0
  %524 = vmatpush1.msra.mxu0 %v507
  %525 = vmatprep.subr.mxu0 0.0
  %526 = vmatpush1.msra.mxu0 %v506
  %527 = vmatprep.subr.mxu0 0.0
  %528 = vmatpush1.msra.mxu0 %v505
  %529 = vmatprep.subr.mxu0 0.0
  %530 = vmatpush1.msra.mxu0 %v504
  %531 = vmatprep.subr.mxu0 0.0
  %532 = vmatpush1.msra.mxu0 %v503
  %533 = vmatprep.subr.mxu0 0.0
  %534 = vmatpush1.msra.mxu0 %v502
  %535 = vmatprep.subr.mxu0 0.0
  %536 = vmatpush1.msra.mxu0 %v501
  %537 = vmatprep.subr.mxu0 0.0
  %538 = vmatpush1.msra.mxu0 %v500
  %539 = vmatprep.subr.mxu0 0.0
  %540 = vmatpush1.msra.mxu0 %v499
  %541 = vmatprep.subr.mxu0 0.0
  %542 = vmatpush1.msra.mxu0 %v498
  %543 = vmatprep.subr.mxu0 0.0
  %544 = vmatpush1.msra.mxu0 %v497
  %545 = vmatprep.subr.mxu0 0.0
  %546 = vmatpush2.msra.mxu0 0.0
  %547 = vmatprep.subr.mxu0 0.0
  %548 = vmatpush2.msra.mxu0 0.0
  %549 = vmatprep.subr.mxu0 0.0
  %550 = vmatpush2.msra.mxu0 0.0
  %551 = vmatprep.subr.mxu0 0.0
  %552 = vmatpush2.msra.mxu0 0.0
  %553 = vmatprep.subr.mxu0 0.0
  %554 = vmatpush2.msra.mxu0 0.0
  %555 = vmatprep.subr.mxu0 0.0
  %556 = vmatpush2.msra.mxu0 0.0
  %557 = vmatprep.subr.mxu0 0.0
  %558 = vmatpush2.msra.mxu0 0.0
  %559 = vmatprep.subr.mxu0 0.0
  %560 = vmatpush2.msra.mxu0 0.0
  %561 = vmatprep.subr.mxu0 0.0
  %562 = vmatpush2.msra.mxu0 0.0
  %563 = vmatprep.subr.mxu0 0.0
  %564 = vmatpush2.msra.mxu0 0.0
  %565 = vmatprep.subr.mxu0 0.0
  %566 = vmatpush2.msra.mxu0 0.0
  %567 = vmatprep.subr.mxu0 0.0
  %568 = vmatpush2.msra.mxu0 0.0
  %569 = vmatprep.subr.mxu0 0.0
  %570 = vmatpush2.msra.mxu0 0.0
  %571 = vmatprep.subr.mxu0 0.0
  %572 = vmatpush2.msra.mxu0 0.0
  %573 = vmatprep.subr.mxu0 0.0
  %574 = vmatpush2.msra.mxu0 0.0
  %575 = vmatprep.subr.mxu0 0.0
  %576 = vmatpush2.msra.mxu0 0.0
  %577 = vmatprep.mubr.f32.mxu0 0.0
  %578 = vmatmul.mubr.f32.gmra.mxu0 %v495
  %v579 = vpop.f32.mrf.mxu0
  %v580 = vadd.f32 0.0, %v579
  %v581 = vpop.f32.mrf.mxu0
  %582 = vdwg.mxu0
  %v583 = vadd.f32 %v133, %v580
  %v584 = vtanh.pop %v583
  %585 = vst [vmem:[%s4 + $0x20] sm:$0xff] %v584
  %v586 = vld [vmem:[%s2] sm:$0xff]
  %v587 = vld [vmem:[%s2 + $0x8] sm:$0xff]
  %v588 = vld [vmem:[%s2 + $0x10] sm:$0xff]
  %v589 = vld [vmem:[%s2 + $0x18] sm:$0xff]
  %v590 = vld [vmem:[%s2 + $0x20] sm:$0xff]
  %v591 = vld [vmem:[%s2 + $0x28] sm:$0xff]
  %v592 = vld [vmem:[%s2 + $0x30] sm:$0xff]
  %v593 = vld [vmem:[%s2 + $0x38] sm:$0xff]
  %v594 = vld [vmem:[%s2 + $0x40] sm:$0xff]
  %v595 = vld [vmem:[%s2 + $0x48] sm:$0xff]
  %v596 = vld [vmem:[%s2 + $0x50] sm:$0xff]
  %v597 = vld [vmem:[%s2 + $0x58] sm:$0xff]
  %v598 = vld [vmem:[%s2 + $0x60] sm:$0xff]
  %v599 = vld [vmem:[%s2 + $0x68] sm:$0xff]
  %v600 = vld [vmem:[%s2 + $0x70] sm:$0xff]
  %v601 = vld [vmem:[%s2 + $0x78] sm:$0xff]
  %602 = vmatprep.subr.mxu0 0.0
  %603 = vmatpush1.msra.mxu0 %v601
  %604 = vmatprep.subr.mxu0 0.0
  %605 = vmatpush1.msra.mxu0 %v600
  %606 = vmatprep.subr.mxu0 0.0
  %607 = vmatpush1.msra.mxu0 %v599
  %608 = vmatprep.subr.mxu0 0.0
  %609 = vmatpush1.msra.mxu0 %v598
  %610 = vmatprep.subr.mxu0 0.0
  %611 = vmatpush1.msra.mxu0 %v597
  %612 = vmatprep.subr.mxu0 0.0
  %613 = vmatpush1.msra.mxu0 %v596
  %614 = vmatprep.subr.mxu0 0.0
  %615 = vmatpush1.msra.mxu0 %v595
  %616 = vmatprep.subr.mxu0 0.0
  %617 = vmatpush1.msra.mxu0 %v594
  %618 = vmatprep.subr.mxu0 0.0
  %619 = vmatpush1.msra.mxu0 %v593
  %620 = vmatprep.subr.mxu0 0.0
  %621 = vmatpush1.msra.mxu0 %v592
  %622 = vmatprep.subr.mxu0 0.0
  %623 = vmatpush1.msra.mxu0 %v591
  %624 = vmatprep.subr.mxu0 0.0
  %625 = vmatpush1.msra.mxu0 %v590
  %626 = vmatprep.subr.mxu0 0.0
  %627 = vmatpush1.msra.mxu0 %v589
  %628 = vmatprep.subr.mxu0 0.0
  %629 = vmatpush1.msra.mxu0 %v588
  %630 = vmatprep.subr.mxu0 0.0
  %631 = vmatpush1.msra.mxu0 %v587
  %632 = vmatprep.subr.mxu0 0.0
  %633 = vmatpush1.msra.mxu0 %v586
  %634 = vmatprep.subr.mxu0 0.0
  %635 = vmatpush2.msra.mxu0 0.0
  %636 = vmatprep.subr.mxu0 0.0
  %637 = vmatpush2.msra.mxu0 0.0
  %638 = vmatprep.subr.mxu0 0.0
  %639 = vmatpush2.msra.mxu0 0.0
  %640 = vmatprep.subr.mxu0 0.0
  %641 = vmatpush2.msra.mxu0 0.0
  %642 = vmatprep.subr.mxu0 0.0
  %643 = vmatpush2.msra.mxu0 0.0
  %644 = vmatprep.subr.mxu0 0.0
  %645 = vmatpush2.msra.mxu0 0.0
  %646 = vmatprep.subr.mxu0 0.0
  %647 = vmatpush2.msra.mxu0 0.0
  %648 = vmatprep.subr.mxu0 0.0
  %649 = vmatpush2.msra.mxu0 0.0
  %650 = vmatprep.subr.mxu0 0.0
  %651 = vmatpush2.msra.mxu0 0.0
  %652 = vmatprep.subr.mxu0 0.0
  %653 = vmatpush2.msra.mxu0 0.0
  %654 = vmatprep.subr.mxu0 0.0
  %655 = vmatpush2.msra.mxu0 0.0
  %656 = vmatprep.subr.mxu0 0.0
  %657 = vmatpush2.msra.mxu0 0.0
  %658 = vmatprep.subr.mxu0 0.0
  %659 = vmatpush2.msra.mxu0 0.0
  %660 = vmatprep.subr.mxu0 0.0
  %661 = vmatpush2.msra.mxu0 0.0
  %662 = vmatprep.subr.mxu0 0.0
  %663 = vmatpush2.msra.mxu0 0.0
  %664 = vmatprep.subr.mxu0 0.0
  %665 = vmatpush2.msra.mxu0 0.0
  %666 = vmatprep.mubr.f32.mxu0 0.0
  %667 = vmatmul.mubr.f32.gmra.mxu0 %v584
  %v668 = vpop.f32.mrf.mxu0
  %v669 = vadd.f32 0.0, %v668
  %v670 = vpop.f32.mrf.mxu0
  %671 = vdwg.mxu0
  %v672 = vadd.f32 %v138, %v669
  %v673 = vtanh.pop %v672
  %674 = vst [vmem:[%s4 + $0x28] sm:$0xff] %v673
  // Predicated region
  $region18: #{rnn_forward.1} parent=0 // pred_check
    _
  $region19: #{rnn_forward.1} parent=0 // pred_check_branch
    %676 = sbr.rel (0) target = $region21
  $region20: #{rnn_forward.1} parent=0 // pred_region
    _
  $region21: #{rnn_forward.1} parent=0 // pred_fallthru
    _
  // Predicated region
  $region22: #{rnn_forward.1} parent=0 // pred_check
    _
  $region23: #{rnn_forward.1} parent=0 // pred_check_branch
    %678 = sbr.rel (0) target = $region25
  $region24: #{rnn_forward.1} parent=0 // pred_region
    _
  $region25: #{rnn_forward.1} parent=0 // pred_fallthru
    _

</llo_original>
